<compile_context>
chip_gen: v7x
topology: tpu7x:2x2x1
jax: 0.10.0
libtpu: 0.0.40
codegen_flags: <defaults>
</compile_context>

<pallas_src>
import jax
import jax.numpy as jnp
from jax.experimental import pallas as pl
from jax.experimental.pallas import tpu as pltpu


def _gather_kernel(counts_ref, feat_ref, ind_ref, out_ref):
    # counts_ref: (B, n_hw) SMEM i32  -- #indices of batch b landing in hw-tile h
    # feat_ref:   (1, C, t_hw) VMEM f32 -- channel-major feature tile
    # ind_ref:    (1, 1, K)   VMEM i32 -- spatial indices into H*W (lane-dense)
    # out_ref:    (1, 1, C, K) VMEM f32 -- partial gathered pred for this (b, h)
    b = pl.program_id(0)
    h = pl.program_id(1)
    t_hw = feat_ref.shape[2]
    cnt = counts_ref[b, h]

    @pl.when(cnt > 0)
    def _gather():
        feat = feat_ref[0]                                              # (C, t_hw)
        ind = ind_ref[0]                                                # (1, K)
        k = ind.shape[1]
        rows = jax.lax.broadcasted_iota(jnp.int32, (t_hw, k), 0)        # (t_hw, K)
        onehot = (rows == (ind - h * t_hw)).astype(jnp.float32)         # (t_hw, K)
        # pred[c, k] = sum_hw feat[c, hw] * (hw == ind[k]); exact f32 on the MXU.
        res = jnp.dot(feat, onehot,
                      precision=jax.lax.Precision.HIGHEST,
                      preferred_element_type=jnp.float32)               # (C, K)
        out_ref[...] = res[None, None]

    @pl.when(cnt == 0)
    def _zero():
        out_ref[...] = jnp.zeros_like(out_ref)


def _pick_hw_tile(hw, c, k, budget_bytes=8 * 1024 * 1024):
    """Largest 128-aligned divisor of hw such that the per-step live VMEM
    (double-buffered (C, t) feat + (t, K) iota/compare/one-hot temporaries)
    stays within budget_bytes:  (2*C + 3*K) * t * 4 <= budget."""
    per_elem_bytes = (2 * c + 3 * k) * 4
    max_elems = max(budget_bytes // per_elem_bytes, 128)
    if hw <= max_elems:
        return hw
    t = min((max_elems // 128) * 128, hw)
    while t >= 128:
        if hw % t == 0:
            return t
        t -= 128
    return hw  # no 128-aligned divisor; fall back to one full-HW block


def l1_loss(output, mask, ind, target):
    """Pallas equivalent of L1Loss.forward(output, mask, ind, target)."""
    B, C, H, W = output.shape
    K = ind.shape[1]
    HW = H * W

    # Channel-major flatten only; no transpose pass over the big feature map.
    feat = output.astype(jnp.float32).reshape(B, C, HW)
    ind2 = ind.astype(jnp.int32).reshape(B, 1, K)          # K lane-dense
    mask_f = mask.astype(jnp.float32)
    target_t = jnp.transpose(target.astype(jnp.float32), (0, 2, 1))   # (B, C, K)

    t_hw = _pick_hw_tile(HW, C, K)
    n_hw = HW // t_hw

    # Per-(batch, hw-tile) count of gathered indices, prefetched into SMEM so the
    # kernel can skip all VPU/MXU work on tiles with no index (sparse CenterNet case).
    tiles = ind2[:, 0, :] // t_hw                                         # (B, K)
    counts = jnp.sum(
        tiles[:, :, None] == jnp.arange(n_hw, dtype=jnp.int32)[None, None, :],
        axis=1, dtype=jnp.int32)                                          # (B, n_hw)

    partials = pl.pallas_call(
        _gather_kernel,
        out_shape=jax.ShapeDtypeStruct((B, n_hw, C, K), jnp.float32),
        grid_spec=pltpu.PrefetchScalarGridSpec(
            num_scalar_prefetch=1,
            grid=(B, n_hw),
            in_specs=[
                pl.BlockSpec((1, C, t_hw), lambda b, h, cnt: (b, 0, h)),
                pl.BlockSpec((1, 1, K), lambda b, h, cnt: (b, 0, 0)),
            ],
            out_specs=pl.BlockSpec((1, 1, C, K), lambda b, h, cnt: (b, h, 0, 0)),
        ),
        compiler_params=pltpu.CompilerParams(
            dimension_semantics=("parallel", "parallel"),
            vmem_limit_bytes=32 * 1024 * 1024),
    )(counts, feat, ind2)

    # Tiny wrapper-side finalize (B*C*K elements): exactly mirrors the PyTorch module.
    pred = jnp.sum(partials, axis=1)                       # (B, C, K) gathered features
    m = mask_f.reshape(B, 1, K)
    lsum = jnp.sum(jnp.abs(pred * m - target_t * m))       # sum-reduced L1
    msum = jnp.float32(C) * jnp.sum(mask_f)                # sum of channel-expanded mask
    return lsum / (msum + 0.0001)


def _l1_loss_ref(output, mask, ind, target):
    """Pure-JAX reference mirroring the PyTorch module exactly, for verification."""
    B, C, H, W = output.shape
    feat = jnp.transpose(output, (0, 2, 3, 1)).reshape(B, H * W, C)
    pred = jnp.take_along_axis(feat, ind[:, :, None].astype(jnp.int32), axis=1)
    m = jnp.broadcast_to(mask.astype(jnp.float32)[:, :, None], pred.shape)
    loss = jnp.sum(jnp.abs(pred * m - target * m))
    return loss / (jnp.sum(m) + 0.0001)


if __name__ == "__main__":
    key = jax.random.PRNGKey(0)
    k1, k2, k3, k4 = jax.random.split(key, 4)

    B, C, H, W, K = 2, 4, 16, 16, 8

    output = jax.random.normal(k1, (B, C, H, W), dtype=jnp.float32)
    target = jax.random.normal(k2, (B, K, C), dtype=jnp.float32)
    ind = jax.random.randint(k3, (B, K), 0, H * W, dtype=jnp.int32)
    mask = (jax.random.uniform(k4, (B, K)) > 0.3).astype(jnp.float32)

    loss = jax.block_until_ready(l1_loss(output, mask, ind, target))
    ref = jax.block_until_ready(_l1_loss_ref(output, mask, ind, target))

    assert jnp.allclose(loss, ref, rtol=1e-5, atol=1e-5), (loss, ref)
    print("KERNEL_OK")
</pallas_src>

<mosaic_0001>
module attributes {stable_mosaic.version = 11 : i64} {
  func.func @_gather_kernel(%arg0: i32, %arg1: i32, %arg2: memref<2x1xi32, #tpu.memory_space<smem>>, %arg3: memref<1x4x256xf32, #tpu.memory_space<vmem>>, %arg4: memref<1x1x8xi32, #tpu.memory_space<vmem>>, %arg5: memref<1x1x4x8xf32, #tpu.memory_space<vmem>>) attributes {dimension_semantics = [#tpu.dimension_semantics<parallel>, #tpu.dimension_semantics<parallel>], iteration_bounds = array<i64: 2, 1>, scalar_prefetch = 1 : i64, scratch_operands = 0 : i64, tpu.core_type = #tpu.core_type<tc>, window_params = [{transform_indices = @transform_0, window_bounds = array<i64: 1, 4, 256>}, {transform_indices = @transform_1, window_bounds = array<i64: 1, 1, 8>}, {transform_indices = @transform_2, window_bounds = array<i64: 1, 1, 4, 8>}]} {
    %0 = arith.index_cast %arg0 : i32 to index
    %1 = arith.index_cast %arg1 : i32 to index
    %2 = memref.load %arg2[%0, %1] : memref<2x1xi32, #tpu.memory_space<smem>>
    %c0_i32 = arith.constant 0 : i32
    %3 = arith.cmpi sgt, %2, %c0_i32 : i32
    %4 = arith.extui %3 : i1 to i32
    %c0_i32_0 = arith.constant 0 : i32
    %5 = arith.cmpi ne, %4, %c0_i32_0 : i32
    scf.if %5 {
      %c0 = arith.constant 0 : index
      %c0_3 = arith.constant 0 : index
      %c0_4 = arith.constant 0 : index
      %9 = vector.load %arg3[%c0, %c0_3, %c0_4] : memref<1x4x256xf32, #tpu.memory_space<vmem>>, vector<1x4x256xf32>
      %10 = vector.shape_cast %9 : vector<1x4x256xf32> to vector<4x256xf32>
      %c0_5 = arith.constant 0 : index
      %c0_6 = arith.constant 0 : index
      %c0_7 = arith.constant 0 : index
      %11 = vector.load %arg4[%c0_5, %c0_6, %c0_7] : memref<1x1x8xi32, #tpu.memory_space<vmem>>, vector<1x1x8xi32>
      %12 = vector.shape_cast %11 : vector<1x1x8xi32> to vector<1x8xi32>
      %13 = tpu.iota {dimensions = array<i32: 0>} : vector<256x8xi32>
      %c256_i32 = arith.constant 256 : i32
      %14 = arith.muli %arg1, %c256_i32 : i32
      %15 = vector.broadcast %14 : i32 to vector<1x8xi32>
      %16 = arith.subi %12, %15 : vector<1x8xi32>
      %17 = vector.broadcast %16 : vector<1x8xi32> to vector<256x8xi32>
      %18 = arith.cmpi eq, %13, %17 : vector<256x8xi32>
      %19 = arith.extui %18 : vector<256x8xi1> to vector<256x8xi32>
      %20 = arith.sitofp %19 : vector<256x8xi32> to vector<256x8xf32>
      %cst = arith.constant dense<0.000000e+00> : vector<4x8xf32>
      %21 = tpu.matmul %10, %20, %cst {dimension_numbers = #tpu.dot_dimension_numbers<[1], [0], [0], [1], [0, 0, 1, 1], [], []>, precision = #tpu.contract_precision<fp32>} : vector<4x256xf32>, vector<256x8xf32>, vector<4x8xf32> -> vector<4x8xf32>
      %22 = vector.shape_cast %21 : vector<4x8xf32> to vector<1x1x4x8xf32>
      %c0_8 = arith.constant 0 : index
      %c0_9 = arith.constant 0 : index
      %c0_10 = arith.constant 0 : index
      %c0_11 = arith.constant 0 : index
      %23 = vector.load %arg5[%c0_8, %c0_9, %c0_10, %c0_11] : memref<1x1x4x8xf32, #tpu.memory_space<vmem>>, vector<1x1x4x8xf32>
      tpu.vector_store %arg5[%c0_8, %c0_9, %c0_10, %c0_11], %22 {strides = array<i32>} : memref<1x1x4x8xf32, #tpu.memory_space<vmem>>, vector<1x1x4x8xf32>,
    } else {
    }
    %c0_i32_1 = arith.constant 0 : i32
    %6 = arith.cmpi eq, %2, %c0_i32_1 : i32
    %7 = arith.extui %6 : i1 to i32
    %c0_i32_2 = arith.constant 0 : i32
    %8 = arith.cmpi ne, %7, %c0_i32_2 : i32
    scf.if %8 {
      %cst = arith.constant 0.000000e+00 : f32
      %9 = vector.broadcast %cst : f32 to vector<1x1x4x8xf32>
      %c0 = arith.constant 0 : index
      %c0_3 = arith.constant 0 : index
      %c0_4 = arith.constant 0 : index
      %c0_5 = arith.constant 0 : index
      %10 = vector.load %arg5[%c0, %c0_3, %c0_4, %c0_5] : memref<1x1x4x8xf32, #tpu.memory_space<vmem>>, vector<1x1x4x8xf32>
      tpu.vector_store %arg5[%c0, %c0_3, %c0_4, %c0_5], %9 {strides = array<i32>} : memref<1x1x4x8xf32, #tpu.memory_space<vmem>>, vector<1x1x4x8xf32>,
    } else {
    }
    return
  }
  func.func @transform_0(%arg0: i32, %arg1: i32, %arg2: memref<2x1xi32, #tpu.memory_space<smem>>) -> (i32, i32, i32) {
    %c0_i32 = arith.constant 0 : i32
    %c0_i32_0 = arith.constant 0 : i32
    return %arg0, %c0_i32, %arg1 : i32, i32, i32
  }
  func.func @transform_1(%arg0: i32, %arg1: i32, %arg2: memref<2x1xi32, #tpu.memory_space<smem>>) -> (i32, i32, i32) {
    %c0_i32 = arith.constant 0 : i32
    %c0_i32_0 = arith.constant 0 : i32
    %c0_i32_1 = arith.constant 0 : i32
    return %arg0, %c0_i32, %c0_i32_0 : i32, i32, i32
  }
  func.func @transform_2(%arg0: i32, %arg1: i32, %arg2: memref<2x1xi32, #tpu.memory_space<smem>>) -> (i32, i32, i32, i32) {
    %c0_i32 = arith.constant 0 : i32
    %c0_i32_0 = arith.constant 0 : i32
    %c0_i32_1 = arith.constant 0 : i32
    return %arg0, %arg1, %c0_i32, %c0_i32_0 : i32, i32, i32, i32
  }
}

</mosaic_0001>

<llo_original>
// kernel: tpu_custom_call.1
$region0: #{tpu_custom_call.1}
  #allocation0 [shape = 'u32[]', space=smem, size = 0x4, offset = 0x4, fixed_abs, tag = 'smem constant byte address 0x4 - core index']
  #allocation1 [shape = 'u32[144,128]{1,0:T(1,128)}', space=vmem, size = 0x12000, scoped, tag = 'internal scratch']
  #allocation2 [shape = 's32[1]{0}', space=sflag, size = 0x4, scoped, tag = 'scoped memory for tpu_custom_call.1']
  #allocation3 [shape = 'u8[1024]{0}', space=smem, size = 0x400, scoped, tag = 'prefetched SMEM operand 0']
  %s0 = inlined_call_operand.vmem [shape: s32[2,1], index: 0, kind: input, shape index: {}]
  %s1 = inlined_call_operand.hbm [shape: f32[2,4,256], index: 1, kind: input, shape index: {}]
  %s2 = inlined_call_operand.vmem [shape: s32[2,1,8], index: 2, kind: input, shape index: {}]
  %s3 = inlined_call_operand.hbm [shape: f32[2,1,4,8], index: 3, kind: output, shape index: {}]
  %s4 = sld [smem:[#allocation0]]
  $region53: #{tpu_custom_call.1} parent=0
    _
  %s6 = ssub.s32 1, %s4
  %s7 = scalar_select 0, %s6, %s4
  %s8 = sshll.u32 %s0, 4
  %s9 = int_to_ptr.vmem [resolvable:$true] %s8
  %11 = dma.vmem_to_smem %s9, 32, [#allocation3], [#allocation2]
  %12 = dma.done [#allocation2], 32
  %13 = sfence
  $region1: #{tpu_custom_call.1} parent=0
    #allocation4 [shape = 'u8[8192]{0}', space=vmem, size = 0x2000, scoped, tag = 'input window, operand 1']
    #allocation5 [shape = 's32[2]{0}', space=sflag, size = 0x8, scoped, tag = 'scoped memory for tpu_custom_call.1']
    #allocation6 [shape = 's32[2]{0}', space=sflag, size = 0x8, scoped, tag = 'scoped memory for tpu_custom_call.1']
    #allocation7 [shape = 'u8[4096]{0}', space=vmem, size = 0x1000, scoped, tag = 'output window, operand 0']
    %14 = vsyncpa [#allocation5], 0
    %s15 = scalar_lea.sflag [#allocation5], 1
    %16 = vsyncpa %s15, 0
    %17 = vsyncpa [#allocation6], 0
    %s18 = scalar_lea.sflag [#allocation6], 1
    %19 = vsyncpa %s18, 0
    loop: start=0, step=1, limit=4
    $region2: #{tpu_custom_call.1} parent=1 // loop_pre_header
      _
    $region3: #{tpu_custom_call.1} parent=1 // loop_header
      %s21 = sphi 0, %s25
      %p22 = scmp.ge.s32.totalorder %s21, 4
      %s28 = sphi 0, %s40
      %s29 = sphi 0, %s36
      %s30 = sphi 0, %s28
      %s31 = sphi 0, %s29
      %s32 = sphi 0, %s30
      %s33 = sphi 0, %s31
      %s45 = sphi 0, %s47
      %s48 = sphi 0, %s45
      %s49 = sphi 0, %s48
      %s65 = sphi 0, %s49
      %s71 = sphi 0, %s73
      %s74 = sphi 0, %s71
      %s75 = sphi 0, %s74
      %s91 = sphi 0, %s75
      %s99 = sphi 0, %s101
      %s102 = sphi 0, %s99
      %s103 = sphi 0, %s102
      %s119 = sphi 0, %s103
    $region4: #{tpu_custom_call.1} parent=1 // loop_header_branch
      %24 = sbr.rel (%p22) target = $region8
    $region5: #{tpu_custom_call.1} parent=1 // loop_body
      %s26 = ssub.s32 %s21, 1
      %s27 = ssub.s32 %s21, 2
      %s34 = sadd.s32 1, %s29
      %p35 = scmp.ge.s32.totalorder %s34, 1
      %s36 = scalar_select %p35, 0, %s34
      %s37 = sadd.s32 1, %s28
      %s38 = scalar_select %p35, %s37, %s28
      %p39 = scmp.ge.s32.totalorder %s38, 2
      %s40 = scalar_select %p39, 0, %s38
      %s41 = ssub.s32 %s28, %s40
      %s42 = ssub.s32 %s29, %s36
      %s43 = sor.u32 %s41, %s42
      %p44 = scmp.eq.s32.totalorder %s43, 0
      %s46 = sadd.s32 %s45, 1
      %s47 = scalar_select %p44, %s45, %s46
      %p50 = pneg %p44
      %p51 = scmp.eq.s32.totalorder %s21, 1
      %p52 = por %p50, %p51
      %p53 = scmp.ne.s32.totalorder %s45, %s48
      %p54 = scmp.eq.s32.totalorder %s21, 0
      %p55 = por %p53, %p54
      %p56 = scmp.ne.s32.totalorder %s45, %s48
      %p57 = scmp.eq.s32.totalorder %s26, 1
      %p58 = por %p56, %p57
      %p59 = scmp.ne.s32.totalorder %s48, %s49
      %p60 = scmp.eq.s32.totalorder %s26, 0
      %p61 = por %p59, %p60
      %p62 = scmp.ne.s32.totalorder %s48, %s49
      %p63 = scmp.eq.s32.totalorder %s27, 1
      %p64 = por %p62, %p63
      %p66 = scmp.ne.s32.totalorder %s49, %s65
      %p67 = scmp.eq.s32.totalorder %s27, 0
      %p68 = por %p66, %p67
      %s69 = ssub.s32 %s28, %s40
      %p70 = scmp.eq.s32.totalorder %s69, 0
      %s72 = sadd.s32 %s71, 1
      %s73 = scalar_select %p70, %s71, %s72
      %p76 = pneg %p70
      %p77 = scmp.eq.s32.totalorder %s21, 1
      %p78 = por %p76, %p77
      %p79 = scmp.ne.s32.totalorder %s71, %s74
      %p80 = scmp.eq.s32.totalorder %s21, 0
      %p81 = por %p79, %p80
      %p82 = scmp.ne.s32.totalorder %s71, %s74
      %p83 = scmp.eq.s32.totalorder %s26, 1
      %p84 = por %p82, %p83
      %p85 = scmp.ne.s32.totalorder %s74, %s75
      %p86 = scmp.eq.s32.totalorder %s26, 0
      %p87 = por %p85, %p86
      %p88 = scmp.ne.s32.totalorder %s74, %s75
      %p89 = scmp.eq.s32.totalorder %s27, 1
      %p90 = por %p88, %p89
      %p92 = scmp.ne.s32.totalorder %s75, %s91
      %p93 = scmp.eq.s32.totalorder %s27, 0
      %p94 = por %p92, %p93
      %s95 = ssub.s32 %s28, %s40
      %s96 = ssub.s32 %s29, %s36
      %s97 = sor.u32 %s95, %s96
      %p98 = scmp.eq.s32.totalorder %s97, 0
      %s100 = sadd.s32 %s99, 1
      %s101 = scalar_select %p98, %s99, %s100
      %p104 = pneg %p98
      %p105 = scmp.eq.s32.totalorder %s21, 1
      %p106 = por %p104, %p105
      %p107 = scmp.ne.s32.totalorder %s99, %s102
      %p108 = scmp.eq.s32.totalorder %s21, 0
      %p109 = por %p107, %p108
      %p110 = scmp.ne.s32.totalorder %s99, %s102
      %p111 = scmp.eq.s32.totalorder %s26, 1
      %p112 = por %p110, %p111
      %p113 = scmp.ne.s32.totalorder %s102, %s103
      %p114 = scmp.eq.s32.totalorder %s26, 0
      %p115 = por %p113, %p114
      %p116 = scmp.ne.s32.totalorder %s102, %s103
      %p117 = scmp.eq.s32.totalorder %s27, 1
      %p118 = por %p116, %p117
      %p120 = scmp.ne.s32.totalorder %s103, %s119
      %p121 = scmp.eq.s32.totalorder %s27, 0
      %p122 = por %p120, %p121
      %p123 = scmp.le.s32.totalorder 1, %s21
      %p124 = scmp.lt.s32.totalorder %s21, 3
      %p125 = pnand %p123, %p124
      %p126 = pneg %p125
      // Predicated region
      $region9: #{tpu_custom_call.1} parent=5 // pred_check
        _
      $region10: #{tpu_custom_call.1} parent=5 // pred_check_branch
        %128 = sbr.rel (%p125) target = $region12
      $region11: #{tpu_custom_call.1} parent=5 // pred_region
        %s129 = ssub.s32 %s21, 1
      $region12: #{tpu_custom_call.1} parent=5 // pred_fallthru
        _
      %p130 = scmp.lt.s32.totalorder %s21, 2
      // Predicated region
      $region13: #{tpu_custom_call.1} parent=5 // pred_check
        %p131 = pneg %p130
      $region14: #{tpu_custom_call.1} parent=5 // pred_check_branch
        %133 = sbr.rel (%p131) target = $region16
      $region15: #{tpu_custom_call.1} parent=5 // pred_region
        // Predicated region
        $region17: #{tpu_custom_call.1} parent=15 // pred_check
          %p134 = pneg %p55
        $region18: #{tpu_custom_call.1} parent=15 // pred_check_branch
          %136 = sbr.rel (%p134) target = $region20
        $region19: #{tpu_custom_call.1} parent=15 // pred_region
          %s137 = sand.u32 %s45, 1
          %s138 = scalar_lea.sflag [#allocation5], %s137
          %s139 = sand.u32 %s45, 1
          %s140 = smul.addr %s139, 8
          %s141 = scalar_lea.vmem [#allocation4], %s140
          %s142 = smul.u32 2, %s29
          %s144 = ssub.s32 128, 128
          %145 = vsyncadd %s138, %s144
          %s146 = smul.addr %s28, 2
          %s147 = sadd.s32 %s142, %s146
          %s148 = smul.addr %s147, 64
          %s149 = scalar_lea.hbm %s1, %s148
          %s151 = sshll.u32 %s141, 4
          %s152 = int_to_ptr.vmem [resolvable:$true] %s151
          %154 = dma.hbm_to_vmem [thread:$0]  %s149, 128, %s152, %s138
        $region20: #{tpu_custom_call.1} parent=15 // pred_fallthru
          _
        // Predicated region
        $region21: #{tpu_custom_call.1} parent=15 // pred_check
          %p155 = pneg %p81
        $region22: #{tpu_custom_call.1} parent=15 // pred_check_branch
          %157 = sbr.rel (%p155) target = $region24
        $region23: #{tpu_custom_call.1} parent=15 // pred_region
          %p158 = scmp.lt.s32.totalorder %s28, 1
          %s159 = scalar_select %p158, %s28, 1
          %s160 = scalar_lea.vmem %s2, %s159
        $region24: #{tpu_custom_call.1} parent=15 // pred_fallthru
          _
      $region16: #{tpu_custom_call.1} parent=5 // pred_fallthru
        _
      %p161 = scmp.le.s32.totalorder 1, %s21
      %p162 = scmp.lt.s32.totalorder %s21, 3
      %p163 = pnand %p161, %p162
      %p164 = pneg %p163
      // Predicated region
      $region25: #{tpu_custom_call.1} parent=5 // pred_check
        _
      $region26: #{tpu_custom_call.1} parent=5 // pred_check_branch
        %166 = sbr.rel (%p163) target = $region28
      $region27: #{tpu_custom_call.1} parent=5 // pred_region
        %s167 = ssub.s32 %s21, 1
        %s168 = sand.u32 %s48, 1
        %s169 = scalar_lea.sflag [#allocation5], %s168
        %s170 = sand.u32 %s48, 1
        %s171 = smul.addr %s170, 8
        %s172 = scalar_lea.vmem [#allocation4], %s171
        // Predicated region
        $region29: #{tpu_custom_call.1} parent=27 // pred_check
          %p173 = pneg %p61
        $region30: #{tpu_custom_call.1} parent=27 // pred_check_branch
          %175 = sbr.rel (%p173) target = $region32
        $region31: #{tpu_custom_call.1} parent=27 // pred_region
          %176 = dma.done %s169, 128
        $region32: #{tpu_custom_call.1} parent=27 // pred_fallthru
          _
        %s177 = sand.u32 %s48, 1
        %s178 = scalar_lea.sflag [#allocation5], %s177
        %s179 = sand.u32 %s48, 1
        %s180 = smul.addr %s179, 8
        %s181 = scalar_lea.vmem [#allocation4], %s180
        %p182 = pneg %p61
        %p183 = pneg %p58
        %p184 = scmp.lt.s32.totalorder %s30, 1
        %s185 = scalar_select %p184, %s30, 1
        %s186 = scalar_lea.vmem %s2, %s185
        %p187 = pneg %p87
        %p188 = pneg %p84
        %p189 = pneg %p115
        %p190 = pneg %p112
        %s191 = sand.u32 %s102, 1
        %s192 = scalar_lea.sflag [#allocation6], %s191
        %s193 = sand.u32 %s102, 1
        %s194 = smul.addr %s193, 4
        %s195 = scalar_lea.vmem [#allocation7], %s194
        %s196 = smul.u32 2, %s31
        %p197 = scmp.lt.s32.totalorder %s30, 1
        %s198 = scalar_select %p197, %s30, 1
        %s199 = scalar_lea.vmem %s2, %s198
        %s200 = sshra.s32 %s31, 7
        %s201 = sand.u32 %s31, 127
        %s202 = sadd.s32 %s200, %s30
        %s203 = smul.u32 %s202, 128
        %s204 = sshra.s32 %s31, 7
        %s205 = sand.u32 %s31, 127
        %s206 = sadd.s32 %s203, %s205
        %s207 = sld [smem:[#allocation3 + %s206]]
        %p208 = scmp.gt.s32.totalorder %s207, 0
        // Predicated region
        $region33: #{tpu_custom_call.1} parent=27 // pred_check
          %p209 = pneg %p208
        $region34: #{tpu_custom_call.1} parent=27 // pred_check_branch
          %211 = sbr.rel (%p209) target = $region36
        $region35: #{tpu_custom_call.1} parent=27 // pred_region
          %v212 = vld [vmem:[%s172] sm:$0xff]
          %v213 = vld [vmem:[%s199] sm:$0x1]
          %v214 = vlaneseq
          %v215 = vshrl.u32 %v214, 7
          %v216 = vadd.s32 %v215, 8
          %v217 = vadd.s32 %v215, 16
          %v218 = vadd.s32 %v215, 24
          %v219 = vadd.s32 %v215, 32
          %v220 = vadd.s32 %v215, 40
          %v221 = vadd.s32 %v215, 48
          %v222 = vadd.s32 %v215, 56
          %v223 = vadd.s32 %v215, 64
          %v224 = vadd.s32 %v215, 72
          %v225 = vadd.s32 %v215, 80
          %v226 = vadd.s32 %v215, 88
          %v227 = vadd.s32 %v215, 96
          %v228 = vadd.s32 %v215, 104
          %v229 = vadd.s32 %v215, 112
          %v230 = vadd.s32 %v215, 120
          %v231 = vadd.s32 %v215, 128
          %v232 = vadd.s32 %v215, 136
          %v233 = vadd.s32 %v215, 144
          %v234 = vadd.s32 %v215, 152
          %v235 = vadd.s32 %v215, 160
          %v236 = vadd.s32 %v215, 168
          %v237 = vadd.s32 %v215, 176
          %v238 = vadd.s32 %v215, 184
          %v239 = vadd.s32 %v215, 192
          %v240 = vadd.s32 %v215, 200
          %v241 = vadd.s32 %v215, 208
          %v242 = vadd.s32 %v215, 216
          %v243 = vadd.s32 %v215, 224
          %v244 = vadd.s32 %v215, 232
          %v245 = vadd.s32 %v215, 240
          %v246 = vadd.s32 %v215, 248
          %s247 = smul.u32 %s31, 256
          %v248 = vstv %s247
          %v249 = vsub.s32 %v213, %v248
          %v250 = vlaneseq
          %v251 = vshrl.u32 %v250, 7
          %v252 = vsub.s32 0, %v251
          %v253 = vrot.slane %v249, %v252
          %vm254 = vcmp.eq.s32.totalorder %v215, %v253
          %vm255 = vcmp.eq.s32.totalorder %v216, %v253
          %vm256 = vcmp.eq.s32.totalorder %v217, %v253
          %vm257 = vcmp.eq.s32.totalorder %v218, %v253
          %vm258 = vcmp.eq.s32.totalorder %v219, %v253
          %vm259 = vcmp.eq.s32.totalorder %v220, %v253
          %vm260 = vcmp.eq.s32.totalorder %v221, %v253
          %vm261 = vcmp.eq.s32.totalorder %v222, %v253
          %vm262 = vcmp.eq.s32.totalorder %v223, %v253
          %vm263 = vcmp.eq.s32.totalorder %v224, %v253
          %vm264 = vcmp.eq.s32.totalorder %v225, %v253
          %vm265 = vcmp.eq.s32.totalorder %v226, %v253
          %vm266 = vcmp.eq.s32.totalorder %v227, %v253
          %vm267 = vcmp.eq.s32.totalorder %v228, %v253
          %vm268 = vcmp.eq.s32.totalorder %v229, %v253
          %vm269 = vcmp.eq.s32.totalorder %v230, %v253
          %vm270 = vcmp.eq.s32.totalorder %v231, %v253
          %vm271 = vcmp.eq.s32.totalorder %v232, %v253
          %vm272 = vcmp.eq.s32.totalorder %v233, %v253
          %vm273 = vcmp.eq.s32.totalorder %v234, %v253
          %vm274 = vcmp.eq.s32.totalorder %v235, %v253
          %vm275 = vcmp.eq.s32.totalorder %v236, %v253
          %vm276 = vcmp.eq.s32.totalorder %v237, %v253
          %vm277 = vcmp.eq.s32.totalorder %v238, %v253
          %vm278 = vcmp.eq.s32.totalorder %v239, %v253
          %vm279 = vcmp.eq.s32.totalorder %v240, %v253
          %vm280 = vcmp.eq.s32.totalorder %v241, %v253
          %vm281 = vcmp.eq.s32.totalorder %v242, %v253
          %vm282 = vcmp.eq.s32.totalorder %v243, %v253
          %vm283 = vcmp.eq.s32.totalorder %v244, %v253
          %vm284 = vcmp.eq.s32.totalorder %v245, %v253
          %vm285 = vcmp.eq.s32.totalorder %v246, %v253
          %v286 = vsel %vm254, 1, 0
          %v287 = vsel %vm255, 1, 0
          %v288 = vsel %vm256, 1, 0
          %v289 = vsel %vm257, 1, 0
          %v290 = vsel %vm258, 1, 0
          %v291 = vsel %vm259, 1, 0
          %v292 = vsel %vm260, 1, 0
          %v293 = vsel %vm261, 1, 0
          %v294 = vsel %vm262, 1, 0
          %v295 = vsel %vm263, 1, 0
          %v296 = vsel %vm264, 1, 0
          %v297 = vsel %vm265, 1, 0
          %v298 = vsel %vm266, 1, 0
          %v299 = vsel %vm267, 1, 0
          %v300 = vsel %vm268, 1, 0
          %v301 = vsel %vm269, 1, 0
          %v302 = vsel %vm270, 1, 0
          %v303 = vsel %vm271, 1, 0
          %v304 = vsel %vm272, 1, 0
          %v305 = vsel %vm273, 1, 0
          %v306 = vsel %vm274, 1, 0
          %v307 = vsel %vm275, 1, 0
          %v308 = vsel %vm276, 1, 0
          %v309 = vsel %vm277, 1, 0
          %v310 = vsel %vm278, 1, 0
          %v311 = vsel %vm279, 1, 0
          %v312 = vsel %vm280, 1, 0
          %v313 = vsel %vm281, 1, 0
          %v314 = vsel %vm282, 1, 0
          %v315 = vsel %vm283, 1, 0
          %v316 = vsel %vm284, 1, 0
          %v317 = vsel %vm285, 1, 0
          %v318 = vcvt.s32.f32 %v286
          %v319 = vcvt.s32.f32 %v287
          %v320 = vcvt.s32.f32 %v288
          %v321 = vcvt.s32.f32 %v289
          %v322 = vcvt.s32.f32 %v290
          %v323 = vcvt.s32.f32 %v291
          %v324 = vcvt.s32.f32 %v292
          %v325 = vcvt.s32.f32 %v293
          %v326 = vcvt.s32.f32 %v294
          %v327 = vcvt.s32.f32 %v295
          %v328 = vcvt.s32.f32 %v296
          %v329 = vcvt.s32.f32 %v297
          %v330 = vcvt.s32.f32 %v298
          %v331 = vcvt.s32.f32 %v299
          %v332 = vcvt.s32.f32 %v300
          %v333 = vcvt.s32.f32 %v301
          %v334 = vcvt.s32.f32 %v302
          %v335 = vcvt.s32.f32 %v303
          %v336 = vcvt.s32.f32 %v304
          %v337 = vcvt.s32.f32 %v305
          %v338 = vcvt.s32.f32 %v306
          %v339 = vcvt.s32.f32 %v307
          %v340 = vcvt.s32.f32 %v308
          %v341 = vcvt.s32.f32 %v309
          %v342 = vcvt.s32.f32 %v310
          %v343 = vcvt.s32.f32 %v311
          %v344 = vcvt.s32.f32 %v312
          %v345 = vcvt.s32.f32 %v313
          %v346 = vcvt.s32.f32 %v314
          %v347 = vcvt.s32.f32 %v315
          %v348 = vcvt.s32.f32 %v316
          %v349 = vcvt.s32.f32 %v317
          %v351 = vcombine.high %v212, %v212
          %353 = vmatprep.subr.mxu0 0.0
          %v354 = vand.u32 %v318, 4294901760
          %355 = vmatpush1.msra.mxu0 %v354
          %356 = vmatprep.subr.mxu0 0.0
          %v357 = vand.u32 %v319, 4294901760
          %358 = vmatpush1.msra.mxu0 %v357
          %359 = vmatprep.subr.mxu0 0.0
          %v360 = vand.u32 %v320, 4294901760
          %361 = vmatpush1.msra.mxu0 %v360
          %362 = vmatprep.subr.mxu0 0.0
          %v363 = vand.u32 %v321, 4294901760
          %364 = vmatpush1.msra.mxu0 %v363
          %365 = vmatprep.subr.mxu0 0.0
          %v366 = vand.u32 %v322, 4294901760
          %367 = vmatpush1.msra.mxu0 %v366
          %368 = vmatprep.subr.mxu0 0.0
          %v369 = vand.u32 %v323, 4294901760
          %370 = vmatpush1.msra.mxu0 %v369
          %371 = vmatprep.subr.mxu0 0.0
          %v372 = vand.u32 %v324, 4294901760
          %373 = vmatpush1.msra.mxu0 %v372
          %374 = vmatprep.subr.mxu0 0.0
          %v375 = vand.u32 %v325, 4294901760
          %376 = vmatpush1.msra.mxu0 %v375
          %377 = vmatprep.subr.mxu0 0.0
          %v378 = vand.u32 %v326, 4294901760
          %379 = vmatpush1.msra.mxu0 %v378
          %380 = vmatprep.subr.mxu0 0.0
          %v381 = vand.u32 %v327, 4294901760
          %382 = vmatpush1.msra.mxu0 %v381
          %383 = vmatprep.subr.mxu0 0.0
          %v384 = vand.u32 %v328, 4294901760
          %385 = vmatpush1.msra.mxu0 %v384
          %386 = vmatprep.subr.mxu0 0.0
          %v387 = vand.u32 %v329, 4294901760
          %388 = vmatpush1.msra.mxu0 %v387
          %389 = vmatprep.subr.mxu0 0.0
          %v390 = vand.u32 %v330, 4294901760
          %391 = vmatpush1.msra.mxu0 %v390
          %392 = vmatprep.subr.mxu0 0.0
          %v393 = vand.u32 %v331, 4294901760
          %394 = vmatpush1.msra.mxu0 %v393
          %395 = vmatprep.subr.mxu0 0.0
          %v396 = vand.u32 %v332, 4294901760
          %397 = vmatpush1.msra.mxu0 %v396
          %398 = vmatprep.subr.mxu0 0.0
          %v399 = vand.u32 %v333, 4294901760
          %400 = vmatpush1.msra.mxu0 %v399
          %401 = vmatprep.subr.mxu0 0.0
          %v402 = vand.u32 %v334, 4294901760
          %403 = vmatpush1.msra.mxu0 %v402
          %404 = vmatprep.subr.mxu0 0.0
          %v405 = vand.u32 %v335, 4294901760
          %406 = vmatpush1.msra.mxu0 %v405
          %407 = vmatprep.subr.mxu0 0.0
          %v408 = vand.u32 %v336, 4294901760
          %409 = vmatpush1.msra.mxu0 %v408
          %410 = vmatprep.subr.mxu0 0.0
          %v411 = vand.u32 %v337, 4294901760
          %412 = vmatpush1.msra.mxu0 %v411
          %413 = vmatprep.subr.mxu0 0.0
          %v414 = vand.u32 %v338, 4294901760
          %415 = vmatpush1.msra.mxu0 %v414
          %416 = vmatprep.subr.mxu0 0.0
          %v417 = vand.u32 %v339, 4294901760
          %418 = vmatpush1.msra.mxu0 %v417
          %419 = vmatprep.subr.mxu0 0.0
          %v420 = vand.u32 %v340, 4294901760
          %421 = vmatpush1.msra.mxu0 %v420
          %422 = vmatprep.subr.mxu0 0.0
          %v423 = vand.u32 %v341, 4294901760
          %424 = vmatpush1.msra.mxu0 %v423
          %425 = vmatprep.subr.mxu0 0.0
          %v426 = vand.u32 %v342, 4294901760
          %427 = vmatpush1.msra.mxu0 %v426
          %428 = vmatprep.subr.mxu0 0.0
          %v429 = vand.u32 %v343, 4294901760
          %430 = vmatpush1.msra.mxu0 %v429
          %431 = vmatprep.subr.mxu0 0.0
          %v432 = vand.u32 %v344, 4294901760
          %433 = vmatpush1.msra.mxu0 %v432
          %434 = vmatprep.subr.mxu0 0.0
          %v435 = vand.u32 %v345, 4294901760
          %436 = vmatpush1.msra.mxu0 %v435
          %437 = vmatprep.subr.mxu0 0.0
          %v438 = vand.u32 %v346, 4294901760
          %439 = vmatpush1.msra.mxu0 %v438
          %440 = vmatprep.subr.mxu0 0.0
          %v441 = vand.u32 %v347, 4294901760
          %442 = vmatpush1.msra.mxu0 %v441
          %443 = vmatprep.subr.mxu0 0.0
          %v444 = vand.u32 %v348, 4294901760
          %445 = vmatpush1.msra.mxu0 %v444
          %446 = vmatprep.subr.mxu0 0.0
          %v447 = vand.u32 %v349, 4294901760
          %448 = vmatpush1.msra.mxu0 %v447
          %v449 = vand.u32 %v351, 4294901760
          %v450 = vsub.f32 %v351, %v449
          %v451 = vand.u32 %v450, 4294901760
          %v452 = vsub.f32 %v450, %v451
          %v453 = vand.u32 %v452, 4294901760
          %454 = vmatprep.mubr.f32.mxu0 %v453
          %v455 = vand.u32 %v212, 4294901760
          %v456 = vsub.f32 %v212, %v455
          %v457 = vand.u32 %v456, 4294901760
          %v458 = vsub.f32 %v456, %v457
          %v459 = vand.u32 %v458, 4294901760
          %460 = vmatmul.mubr.f32.gmra.mrb[0].mxu0 %v459
          %v461 = vpop.f32.mrb[0].mxu0
          %v462 = vadd.f32 0.0, %v461
          %v463 = vpop.f32.mrb[0].mxu0
          %464 = vdwg.mxu0
          %465 = vmatprep.subr.mxu0 0.0
          %v466 = vand.u32 %v318, 4294901760
          %v467 = vsub.f32 %v318, %v466
          %v468 = vand.u32 %v467, 4294901760
          %v469 = vsub.f32 %v467, %v468
          %v470 = vand.u32 %v469, 4294901760
          %471 = vmatpush1.msra.mxu0 %v470
          %472 = vmatprep.subr.mxu0 0.0
          %v473 = vand.u32 %v319, 4294901760
          %v474 = vsub.f32 %v319, %v473
          %v475 = vand.u32 %v474, 4294901760
          %v476 = vsub.f32 %v474, %v475
          %v477 = vand.u32 %v476, 4294901760
          %478 = vmatpush1.msra.mxu0 %v477
          %479 = vmatprep.subr.mxu0 0.0
          %v480 = vand.u32 %v320, 4294901760
          %v481 = vsub.f32 %v320, %v480
          %v482 = vand.u32 %v481, 4294901760
          %v483 = vsub.f32 %v481, %v482
          %v484 = vand.u32 %v483, 4294901760
          %485 = vmatpush1.msra.mxu0 %v484
          %486 = vmatprep.subr.mxu0 0.0
          %v487 = vand.u32 %v321, 4294901760
          %v488 = vsub.f32 %v321, %v487
          %v489 = vand.u32 %v488, 4294901760
          %v490 = vsub.f32 %v488, %v489
          %v491 = vand.u32 %v490, 4294901760
          %492 = vmatpush1.msra.mxu0 %v491
          %493 = vmatprep.subr.mxu0 0.0
          %v494 = vand.u32 %v322, 4294901760
          %v495 = vsub.f32 %v322, %v494
          %v496 = vand.u32 %v495, 4294901760
          %v497 = vsub.f32 %v495, %v496
          %v498 = vand.u32 %v497, 4294901760
          %499 = vmatpush1.msra.mxu0 %v498
          %500 = vmatprep.subr.mxu0 0.0
          %v501 = vand.u32 %v323, 4294901760
          %v502 = vsub.f32 %v323, %v501
          %v503 = vand.u32 %v502, 4294901760
          %v504 = vsub.f32 %v502, %v503
          %v505 = vand.u32 %v504, 4294901760
          %506 = vmatpush1.msra.mxu0 %v505
          %507 = vmatprep.subr.mxu0 0.0
          %v508 = vand.u32 %v324, 4294901760
          %v509 = vsub.f32 %v324, %v508
          %v510 = vand.u32 %v509, 4294901760
          %v511 = vsub.f32 %v509, %v510
          %v512 = vand.u32 %v511, 4294901760
          %513 = vmatpush1.msra.mxu0 %v512
          %514 = vmatprep.subr.mxu0 0.0
          %v515 = vand.u32 %v325, 4294901760
          %v516 = vsub.f32 %v325, %v515
          %v517 = vand.u32 %v516, 4294901760
          %v518 = vsub.f32 %v516, %v517
          %v519 = vand.u32 %v518, 4294901760
          %520 = vmatpush1.msra.mxu0 %v519
          %521 = vmatprep.subr.mxu0 0.0
          %v522 = vand.u32 %v326, 4294901760
          %v523 = vsub.f32 %v326, %v522
          %v524 = vand.u32 %v523, 4294901760
          %v525 = vsub.f32 %v523, %v524
          %v526 = vand.u32 %v525, 4294901760
          %527 = vmatpush1.msra.mxu0 %v526
          %528 = vmatprep.subr.mxu0 0.0
          %v529 = vand.u32 %v327, 4294901760
          %v530 = vsub.f32 %v327, %v529
          %v531 = vand.u32 %v530, 4294901760
          %v532 = vsub.f32 %v530, %v531
          %v533 = vand.u32 %v532, 4294901760
          %534 = vmatpush1.msra.mxu0 %v533
          %535 = vmatprep.subr.mxu0 0.0
          %v536 = vand.u32 %v328, 4294901760
          %v537 = vsub.f32 %v328, %v536
          %v538 = vand.u32 %v537, 4294901760
          %v539 = vsub.f32 %v537, %v538
          %v540 = vand.u32 %v539, 4294901760
          %541 = vmatpush1.msra.mxu0 %v540
          %542 = vmatprep.subr.mxu0 0.0
          %v543 = vand.u32 %v329, 4294901760
          %v544 = vsub.f32 %v329, %v543
          %v545 = vand.u32 %v544, 4294901760
          %v546 = vsub.f32 %v544, %v545
          %v547 = vand.u32 %v546, 4294901760
          %548 = vmatpush1.msra.mxu0 %v547
          %549 = vmatprep.subr.mxu0 0.0
          %v550 = vand.u32 %v330, 4294901760
          %v551 = vsub.f32 %v330, %v550
          %v552 = vand.u32 %v551, 4294901760
          %v553 = vsub.f32 %v551, %v552
          %v554 = vand.u32 %v553, 4294901760
          %555 = vmatpush1.msra.mxu0 %v554
          %556 = vmatprep.subr.mxu0 0.0
          %v557 = vand.u32 %v331, 4294901760
          %v558 = vsub.f32 %v331, %v557
          %v559 = vand.u32 %v558, 4294901760
          %v560 = vsub.f32 %v558, %v559
          %v561 = vand.u32 %v560, 4294901760
          %562 = vmatpush1.msra.mxu0 %v561
          %563 = vmatprep.subr.mxu0 0.0
          %v564 = vand.u32 %v332, 4294901760
          %v565 = vsub.f32 %v332, %v564
          %v566 = vand.u32 %v565, 4294901760
          %v567 = vsub.f32 %v565, %v566
          %v568 = vand.u32 %v567, 4294901760
          %569 = vmatpush1.msra.mxu0 %v568
          %570 = vmatprep.subr.mxu0 0.0
          %v571 = vand.u32 %v333, 4294901760
          %v572 = vsub.f32 %v333, %v571
          %v573 = vand.u32 %v572, 4294901760
          %v574 = vsub.f32 %v572, %v573
          %v575 = vand.u32 %v574, 4294901760
          %576 = vmatpush1.msra.mxu0 %v575
          %577 = vmatprep.subr.mxu0 0.0
          %v578 = vand.u32 %v334, 4294901760
          %v579 = vsub.f32 %v334, %v578
          %v580 = vand.u32 %v579, 4294901760
          %v581 = vsub.f32 %v579, %v580
          %v582 = vand.u32 %v581, 4294901760
          %583 = vmatpush1.msra.mxu0 %v582
          %584 = vmatprep.subr.mxu0 0.0
          %v585 = vand.u32 %v335, 4294901760
          %v586 = vsub.f32 %v335, %v585
          %v587 = vand.u32 %v586, 4294901760
          %v588 = vsub.f32 %v586, %v587
          %v589 = vand.u32 %v588, 4294901760
          %590 = vmatpush1.msra.mxu0 %v589
          %591 = vmatprep.subr.mxu0 0.0
          %v592 = vand.u32 %v336, 4294901760
          %v593 = vsub.f32 %v336, %v592
          %v594 = vand.u32 %v593, 4294901760
          %v595 = vsub.f32 %v593, %v594
          %v596 = vand.u32 %v595, 4294901760
          %597 = vmatpush1.msra.mxu0 %v596
          %598 = vmatprep.subr.mxu0 0.0
          %v599 = vand.u32 %v337, 4294901760
          %v600 = vsub.f32 %v337, %v599
          %v601 = vand.u32 %v600, 4294901760
          %v602 = vsub.f32 %v600, %v601
          %v603 = vand.u32 %v602, 4294901760
          %604 = vmatpush1.msra.mxu0 %v603
          %605 = vmatprep.subr.mxu0 0.0
          %v606 = vand.u32 %v338, 4294901760
          %v607 = vsub.f32 %v338, %v606
          %v608 = vand.u32 %v607, 4294901760
          %v609 = vsub.f32 %v607, %v608
          %v610 = vand.u32 %v609, 4294901760
          %611 = vmatpush1.msra.mxu0 %v610
          %612 = vmatprep.subr.mxu0 0.0
          %v613 = vand.u32 %v339, 4294901760
          %v614 = vsub.f32 %v339, %v613
          %v615 = vand.u32 %v614, 4294901760
          %v616 = vsub.f32 %v614, %v615
          %v617 = vand.u32 %v616, 4294901760
          %618 = vmatpush1.msra.mxu0 %v617
          %619 = vmatprep.subr.mxu0 0.0
          %v620 = vand.u32 %v340, 4294901760
          %v621 = vsub.f32 %v340, %v620
          %v622 = vand.u32 %v621, 4294901760
          %v623 = vsub.f32 %v621, %v622
          %v624 = vand.u32 %v623, 4294901760
          %625 = vmatpush1.msra.mxu0 %v624
          %626 = vmatprep.subr.mxu0 0.0
          %v627 = vand.u32 %v341, 4294901760
          %v628 = vsub.f32 %v341, %v627
          %v629 = vand.u32 %v628, 4294901760
          %v630 = vsub.f32 %v628, %v629
          %v631 = vand.u32 %v630, 4294901760
          %632 = vmatpush1.msra.mxu0 %v631
          %633 = vmatprep.subr.mxu0 0.0
          %v634 = vand.u32 %v342, 4294901760
          %v635 = vsub.f32 %v342, %v634
          %v636 = vand.u32 %v635, 4294901760
          %v637 = vsub.f32 %v635, %v636
          %v638 = vand.u32 %v637, 4294901760
          %639 = vmatpush1.msra.mxu0 %v638
          %640 = vmatprep.subr.mxu0 0.0
          %v641 = vand.u32 %v343, 4294901760
          %v642 = vsub.f32 %v343, %v641
          %v643 = vand.u32 %v642, 4294901760
          %v644 = vsub.f32 %v642, %v643
          %v645 = vand.u32 %v644, 4294901760
          %646 = vmatpush1.msra.mxu0 %v645
          %647 = vmatprep.subr.mxu0 0.0
          %v648 = vand.u32 %v344, 4294901760
          %v649 = vsub.f32 %v344, %v648
          %v650 = vand.u32 %v649, 4294901760
          %v651 = vsub.f32 %v649, %v650
          %v652 = vand.u32 %v651, 4294901760
          %653 = vmatpush1.msra.mxu0 %v652
          %654 = vmatprep.subr.mxu0 0.0
          %v655 = vand.u32 %v345, 4294901760
          %v656 = vsub.f32 %v345, %v655
          %v657 = vand.u32 %v656, 4294901760
          %v658 = vsub.f32 %v656, %v657
          %v659 = vand.u32 %v658, 4294901760
          %660 = vmatpush1.msra.mxu0 %v659
          %661 = vmatprep.subr.mxu0 0.0
          %v662 = vand.u32 %v346, 4294901760
          %v663 = vsub.f32 %v346, %v662
          %v664 = vand.u32 %v663, 4294901760
          %v665 = vsub.f32 %v663, %v664
          %v666 = vand.u32 %v665, 4294901760
          %667 = vmatpush1.msra.mxu0 %v666
          %668 = vmatprep.subr.mxu0 0.0
          %v669 = vand.u32 %v347, 4294901760
          %v670 = vsub.f32 %v347, %v669
          %v671 = vand.u32 %v670, 4294901760
          %v672 = vsub.f32 %v670, %v671
          %v673 = vand.u32 %v672, 4294901760
          %674 = vmatpush1.msra.mxu0 %v673
          %675 = vmatprep.subr.mxu0 0.0
          %v676 = vand.u32 %v348, 4294901760
          %v677 = vsub.f32 %v348, %v676
          %v678 = vand.u32 %v677, 4294901760
          %v679 = vsub.f32 %v677, %v678
          %v680 = vand.u32 %v679, 4294901760
          %681 = vmatpush1.msra.mxu0 %v680
          %682 = vmatprep.subr.mxu0 0.0
          %v683 = vand.u32 %v349, 4294901760
          %v684 = vsub.f32 %v349, %v683
          %v685 = vand.u32 %v684, 4294901760
          %v686 = vsub.f32 %v684, %v685
          %v687 = vand.u32 %v686, 4294901760
          %688 = vmatpush1.msra.mxu0 %v687
          %v689 = vand.u32 %v351, 4294901760
          %690 = vmatprep.mubr.f32.mxu0 %v689
          %v691 = vand.u32 %v212, 4294901760
          %692 = vmatmul.mubr.f32.gmra.mrb[0].mxu0 %v691
          %v693 = vpop.f32.mrb[0].mxu0
          %v694 = vadd.f32 %v462, %v693
          %v695 = vpop.f32.mrb[0].mxu0
          %696 = vdwg.mxu0
          %697 = vmatprep.subr.mxu0 0.0
          %v698 = vand.u32 %v318, 4294901760
          %v699 = vsub.f32 %v318, %v698
          %700 = vmatpush1.msra.mxu0 %v699
          %701 = vmatprep.subr.mxu0 0.0
          %v702 = vand.u32 %v319, 4294901760
          %v703 = vsub.f32 %v319, %v702
          %704 = vmatpush1.msra.mxu0 %v703
          %705 = vmatprep.subr.mxu0 0.0
          %v706 = vand.u32 %v320, 4294901760
          %v707 = vsub.f32 %v320, %v706
          %708 = vmatpush1.msra.mxu0 %v707
          %709 = vmatprep.subr.mxu0 0.0
          %v710 = vand.u32 %v321, 4294901760
          %v711 = vsub.f32 %v321, %v710
          %712 = vmatpush1.msra.mxu0 %v711
          %713 = vmatprep.subr.mxu0 0.0
          %v714 = vand.u32 %v322, 4294901760
          %v715 = vsub.f32 %v322, %v714
          %716 = vmatpush1.msra.mxu0 %v715
          %717 = vmatprep.subr.mxu0 0.0
          %v718 = vand.u32 %v323, 4294901760
          %v719 = vsub.f32 %v323, %v718
          %720 = vmatpush1.msra.mxu0 %v719
          %721 = vmatprep.subr.mxu0 0.0
          %v722 = vand.u32 %v324, 4294901760
          %v723 = vsub.f32 %v324, %v722
          %724 = vmatpush1.msra.mxu0 %v723
          %725 = vmatprep.subr.mxu0 0.0
          %v726 = vand.u32 %v325, 4294901760
          %v727 = vsub.f32 %v325, %v726
          %728 = vmatpush1.msra.mxu0 %v727
          %729 = vmatprep.subr.mxu0 0.0
          %v730 = vand.u32 %v326, 4294901760
          %v731 = vsub.f32 %v326, %v730
          %732 = vmatpush1.msra.mxu0 %v731
          %733 = vmatprep.subr.mxu0 0.0
          %v734 = vand.u32 %v327, 4294901760
          %v735 = vsub.f32 %v327, %v734
          %736 = vmatpush1.msra.mxu0 %v735
          %737 = vmatprep.subr.mxu0 0.0
          %v738 = vand.u32 %v328, 4294901760
          %v739 = vsub.f32 %v328, %v738
          %740 = vmatpush1.msra.mxu0 %v739
          %741 = vmatprep.subr.mxu0 0.0
          %v742 = vand.u32 %v329, 4294901760
          %v743 = vsub.f32 %v329, %v742
          %744 = vmatpush1.msra.mxu0 %v743
          %745 = vmatprep.subr.mxu0 0.0
          %v746 = vand.u32 %v330, 4294901760
          %v747 = vsub.f32 %v330, %v746
          %748 = vmatpush1.msra.mxu0 %v747
          %749 = vmatprep.subr.mxu0 0.0
          %v750 = vand.u32 %v331, 4294901760
          %v751 = vsub.f32 %v331, %v750
          %752 = vmatpush1.msra.mxu0 %v751
          %753 = vmatprep.subr.mxu0 0.0
          %v754 = vand.u32 %v332, 4294901760
          %v755 = vsub.f32 %v332, %v754
          %756 = vmatpush1.msra.mxu0 %v755
          %757 = vmatprep.subr.mxu0 0.0
          %v758 = vand.u32 %v333, 4294901760
          %v759 = vsub.f32 %v333, %v758
          %760 = vmatpush1.msra.mxu0 %v759
          %761 = vmatprep.subr.mxu0 0.0
          %v762 = vand.u32 %v334, 4294901760
          %v763 = vsub.f32 %v334, %v762
          %764 = vmatpush1.msra.mxu0 %v763
          %765 = vmatprep.subr.mxu0 0.0
          %v766 = vand.u32 %v335, 4294901760
          %v767 = vsub.f32 %v335, %v766
          %768 = vmatpush1.msra.mxu0 %v767
          %769 = vmatprep.subr.mxu0 0.0
          %v770 = vand.u32 %v336, 4294901760
          %v771 = vsub.f32 %v336, %v770
          %772 = vmatpush1.msra.mxu0 %v771
          %773 = vmatprep.subr.mxu0 0.0
          %v774 = vand.u32 %v337, 4294901760
          %v775 = vsub.f32 %v337, %v774
          %776 = vmatpush1.msra.mxu0 %v775
          %777 = vmatprep.subr.mxu0 0.0
          %v778 = vand.u32 %v338, 4294901760
          %v779 = vsub.f32 %v338, %v778
          %780 = vmatpush1.msra.mxu0 %v779
          %781 = vmatprep.subr.mxu0 0.0
          %v782 = vand.u32 %v339, 4294901760
          %v783 = vsub.f32 %v339, %v782
          %784 = vmatpush1.msra.mxu0 %v783
          %785 = vmatprep.subr.mxu0 0.0
          %v786 = vand.u32 %v340, 4294901760
          %v787 = vsub.f32 %v340, %v786
          %788 = vmatpush1.msra.mxu0 %v787
          %789 = vmatprep.subr.mxu0 0.0
          %v790 = vand.u32 %v341, 4294901760
          %v791 = vsub.f32 %v341, %v790
          %792 = vmatpush1.msra.mxu0 %v791
          %793 = vmatprep.subr.mxu0 0.0
          %v794 = vand.u32 %v342, 4294901760
          %v795 = vsub.f32 %v342, %v794
          %796 = vmatpush1.msra.mxu0 %v795
          %797 = vmatprep.subr.mxu0 0.0
          %v798 = vand.u32 %v343, 4294901760
          %v799 = vsub.f32 %v343, %v798
          %800 = vmatpush1.msra.mxu0 %v799
          %801 = vmatprep.subr.mxu0 0.0
          %v802 = vand.u32 %v344, 4294901760
          %v803 = vsub.f32 %v344, %v802
          %804 = vmatpush1.msra.mxu0 %v803
          %805 = vmatprep.subr.mxu0 0.0
          %v806 = vand.u32 %v345, 4294901760
          %v807 = vsub.f32 %v345, %v806
          %808 = vmatpush1.msra.mxu0 %v807
          %809 = vmatprep.subr.mxu0 0.0
          %v810 = vand.u32 %v346, 4294901760
          %v811 = vsub.f32 %v346, %v810
          %812 = vmatpush1.msra.mxu0 %v811
          %813 = vmatprep.subr.mxu0 0.0
          %v814 = vand.u32 %v347, 4294901760
          %v815 = vsub.f32 %v347, %v814
          %816 = vmatpush1.msra.mxu0 %v815
          %817 = vmatprep.subr.mxu0 0.0
          %v818 = vand.u32 %v348, 4294901760
          %v819 = vsub.f32 %v348, %v818
          %820 = vmatpush1.msra.mxu0 %v819
          %821 = vmatprep.subr.mxu0 0.0
          %v822 = vand.u32 %v349, 4294901760
          %v823 = vsub.f32 %v349, %v822
          %824 = vmatpush1.msra.mxu0 %v823
          %v825 = vand.u32 %v351, 4294901760
          %v826 = vsub.f32 %v351, %v825
          %827 = vmatprep.mubr.f32.mxu0 %v826
          %v828 = vand.u32 %v212, 4294901760
          %v829 = vsub.f32 %v212, %v828
          %830 = vmatmul.mubr.f32.gmra.mrb[0].mxu0 %v829
          %v831 = vpop.f32.mrb[0].mxu0
          %v832 = vadd.f32 %v694, %v831
          %v833 = vpop.f32.mrb[0].mxu0
          %834 = vdwg.mxu0
          %835 = vmatprep.subr.mxu0 0.0
          %v836 = vand.u32 %v318, 4294901760
          %837 = vmatpush1.msra.mxu0 %v836
          %838 = vmatprep.subr.mxu0 0.0
          %v839 = vand.u32 %v319, 4294901760
          %840 = vmatpush1.msra.mxu0 %v839
          %841 = vmatprep.subr.mxu0 0.0
          %v842 = vand.u32 %v320, 4294901760
          %843 = vmatpush1.msra.mxu0 %v842
          %844 = vmatprep.subr.mxu0 0.0
          %v845 = vand.u32 %v321, 4294901760
          %846 = vmatpush1.msra.mxu0 %v845
          %847 = vmatprep.subr.mxu0 0.0
          %v848 = vand.u32 %v322, 4294901760
          %849 = vmatpush1.msra.mxu0 %v848
          %850 = vmatprep.subr.mxu0 0.0
          %v851 = vand.u32 %v323, 4294901760
          %852 = vmatpush1.msra.mxu0 %v851
          %853 = vmatprep.subr.mxu0 0.0
          %v854 = vand.u32 %v324, 4294901760
          %855 = vmatpush1.msra.mxu0 %v854
          %856 = vmatprep.subr.mxu0 0.0
          %v857 = vand.u32 %v325, 4294901760
          %858 = vmatpush1.msra.mxu0 %v857
          %859 = vmatprep.subr.mxu0 0.0
          %v860 = vand.u32 %v326, 4294901760
          %861 = vmatpush1.msra.mxu0 %v860
          %862 = vmatprep.subr.mxu0 0.0
          %v863 = vand.u32 %v327, 4294901760
          %864 = vmatpush1.msra.mxu0 %v863
          %865 = vmatprep.subr.mxu0 0.0
          %v866 = vand.u32 %v328, 4294901760
          %867 = vmatpush1.msra.mxu0 %v866
          %868 = vmatprep.subr.mxu0 0.0
          %v869 = vand.u32 %v329, 4294901760
          %870 = vmatpush1.msra.mxu0 %v869
          %871 = vmatprep.subr.mxu0 0.0
          %v872 = vand.u32 %v330, 4294901760
          %873 = vmatpush1.msra.mxu0 %v872
          %874 = vmatprep.subr.mxu0 0.0
          %v875 = vand.u32 %v331, 4294901760
          %876 = vmatpush1.msra.mxu0 %v875
          %877 = vmatprep.subr.mxu0 0.0
          %v878 = vand.u32 %v332, 4294901760
          %879 = vmatpush1.msra.mxu0 %v878
          %880 = vmatprep.subr.mxu0 0.0
          %v881 = vand.u32 %v333, 4294901760
          %882 = vmatpush1.msra.mxu0 %v881
          %883 = vmatprep.subr.mxu0 0.0
          %v884 = vand.u32 %v334, 4294901760
          %885 = vmatpush1.msra.mxu0 %v884
          %886 = vmatprep.subr.mxu0 0.0
          %v887 = vand.u32 %v335, 4294901760
          %888 = vmatpush1.msra.mxu0 %v887
          %889 = vmatprep.subr.mxu0 0.0
          %v890 = vand.u32 %v336, 4294901760
          %891 = vmatpush1.msra.mxu0 %v890
          %892 = vmatprep.subr.mxu0 0.0
          %v893 = vand.u32 %v337, 4294901760
          %894 = vmatpush1.msra.mxu0 %v893
          %895 = vmatprep.subr.mxu0 0.0
          %v896 = vand.u32 %v338, 4294901760
          %897 = vmatpush1.msra.mxu0 %v896
          %898 = vmatprep.subr.mxu0 0.0
          %v899 = vand.u32 %v339, 4294901760
          %900 = vmatpush1.msra.mxu0 %v899
          %901 = vmatprep.subr.mxu0 0.0
          %v902 = vand.u32 %v340, 4294901760
          %903 = vmatpush1.msra.mxu0 %v902
          %904 = vmatprep.subr.mxu0 0.0
          %v905 = vand.u32 %v341, 4294901760
          %906 = vmatpush1.msra.mxu0 %v905
          %907 = vmatprep.subr.mxu0 0.0
          %v908 = vand.u32 %v342, 4294901760
          %909 = vmatpush1.msra.mxu0 %v908
          %910 = vmatprep.subr.mxu0 0.0
          %v911 = vand.u32 %v343, 4294901760
          %912 = vmatpush1.msra.mxu0 %v911
          %913 = vmatprep.subr.mxu0 0.0
          %v914 = vand.u32 %v344, 4294901760
          %915 = vmatpush1.msra.mxu0 %v914
          %916 = vmatprep.subr.mxu0 0.0
          %v917 = vand.u32 %v345, 4294901760
          %918 = vmatpush1.msra.mxu0 %v917
          %919 = vmatprep.subr.mxu0 0.0
          %v920 = vand.u32 %v346, 4294901760
          %921 = vmatpush1.msra.mxu0 %v920
          %922 = vmatprep.subr.mxu0 0.0
          %v923 = vand.u32 %v347, 4294901760
          %924 = vmatpush1.msra.mxu0 %v923
          %925 = vmatprep.subr.mxu0 0.0
          %v926 = vand.u32 %v348, 4294901760
          %927 = vmatpush1.msra.mxu0 %v926
          %928 = vmatprep.subr.mxu0 0.0
          %v929 = vand.u32 %v349, 4294901760
          %930 = vmatpush1.msra.mxu0 %v929
          %v931 = vand.u32 %v351, 4294901760
          %v932 = vsub.f32 %v351, %v931
          %v933 = vand.u32 %v932, 4294901760
          %934 = vmatprep.mubr.f32.mxu0 %v933
          %v935 = vand.u32 %v212, 4294901760
          %v936 = vsub.f32 %v212, %v935
          %v937 = vand.u32 %v936, 4294901760
          %938 = vmatmul.mubr.f32.gmra.mrb[0].mxu0 %v937
          %v939 = vpop.f32.mrb[0].mxu0
          %v940 = vadd.f32 %v832, %v939
          %v941 = vpop.f32.mrb[0].mxu0
          %942 = vdwg.mxu0
          %943 = vmatprep.subr.mxu0 0.0
          %v944 = vand.u32 %v318, 4294901760
          %v945 = vsub.f32 %v318, %v944
          %v946 = vand.u32 %v945, 4294901760
          %947 = vmatpush1.msra.mxu0 %v946
          %948 = vmatprep.subr.mxu0 0.0
          %v949 = vand.u32 %v319, 4294901760
          %v950 = vsub.f32 %v319, %v949
          %v951 = vand.u32 %v950, 4294901760
          %952 = vmatpush1.msra.mxu0 %v951
          %953 = vmatprep.subr.mxu0 0.0
          %v954 = vand.u32 %v320, 4294901760
          %v955 = vsub.f32 %v320, %v954
          %v956 = vand.u32 %v955, 4294901760
          %957 = vmatpush1.msra.mxu0 %v956
          %958 = vmatprep.subr.mxu0 0.0
          %v959 = vand.u32 %v321, 4294901760
          %v960 = vsub.f32 %v321, %v959
          %v961 = vand.u32 %v960, 4294901760
          %962 = vmatpush1.msra.mxu0 %v961
          %963 = vmatprep.subr.mxu0 0.0
          %v964 = vand.u32 %v322, 4294901760
          %v965 = vsub.f32 %v322, %v964
          %v966 = vand.u32 %v965, 4294901760
          %967 = vmatpush1.msra.mxu0 %v966
          %968 = vmatprep.subr.mxu0 0.0
          %v969 = vand.u32 %v323, 4294901760
          %v970 = vsub.f32 %v323, %v969
          %v971 = vand.u32 %v970, 4294901760
          %972 = vmatpush1.msra.mxu0 %v971
          %973 = vmatprep.subr.mxu0 0.0
          %v974 = vand.u32 %v324, 4294901760
          %v975 = vsub.f32 %v324, %v974
          %v976 = vand.u32 %v975, 4294901760
          %977 = vmatpush1.msra.mxu0 %v976
          %978 = vmatprep.subr.mxu0 0.0
          %v979 = vand.u32 %v325, 4294901760
          %v980 = vsub.f32 %v325, %v979
          %v981 = vand.u32 %v980, 4294901760
          %982 = vmatpush1.msra.mxu0 %v981
          %983 = vmatprep.subr.mxu0 0.0
          %v984 = vand.u32 %v326, 4294901760
          %v985 = vsub.f32 %v326, %v984
          %v986 = vand.u32 %v985, 4294901760
          %987 = vmatpush1.msra.mxu0 %v986
          %988 = vmatprep.subr.mxu0 0.0
          %v989 = vand.u32 %v327, 4294901760
          %v990 = vsub.f32 %v327, %v989
          %v991 = vand.u32 %v990, 4294901760
          %992 = vmatpush1.msra.mxu0 %v991
          %993 = vmatprep.subr.mxu0 0.0
          %v994 = vand.u32 %v328, 4294901760
          %v995 = vsub.f32 %v328, %v994
          %v996 = vand.u32 %v995, 4294901760
          %997 = vmatpush1.msra.mxu0 %v996
          %998 = vmatprep.subr.mxu0 0.0
          %v999 = vand.u32 %v329, 4294901760
          %v1000 = vsub.f32 %v329, %v999
          %v1001 = vand.u32 %v1000, 4294901760
          %1002 = vmatpush1.msra.mxu0 %v1001
          %1003 = vmatprep.subr.mxu0 0.0
          %v1004 = vand.u32 %v330, 4294901760
          %v1005 = vsub.f32 %v330, %v1004
          %v1006 = vand.u32 %v1005, 4294901760
          %1007 = vmatpush1.msra.mxu0 %v1006
          %1008 = vmatprep.subr.mxu0 0.0
          %v1009 = vand.u32 %v331, 4294901760
          %v1010 = vsub.f32 %v331, %v1009
          %v1011 = vand.u32 %v1010, 4294901760
          %1012 = vmatpush1.msra.mxu0 %v1011
          %1013 = vmatprep.subr.mxu0 0.0
          %v1014 = vand.u32 %v332, 4294901760
          %v1015 = vsub.f32 %v332, %v1014
          %v1016 = vand.u32 %v1015, 4294901760
          %1017 = vmatpush1.msra.mxu0 %v1016
          %1018 = vmatprep.subr.mxu0 0.0
          %v1019 = vand.u32 %v333, 4294901760
          %v1020 = vsub.f32 %v333, %v1019
          %v1021 = vand.u32 %v1020, 4294901760
          %1022 = vmatpush1.msra.mxu0 %v1021
          %1023 = vmatprep.subr.mxu0 0.0
          %v1024 = vand.u32 %v334, 4294901760
          %v1025 = vsub.f32 %v334, %v1024
          %v1026 = vand.u32 %v1025, 4294901760
          %1027 = vmatpush1.msra.mxu0 %v1026
          %1028 = vmatprep.subr.mxu0 0.0
          %v1029 = vand.u32 %v335, 4294901760
          %v1030 = vsub.f32 %v335, %v1029
          %v1031 = vand.u32 %v1030, 4294901760
          %1032 = vmatpush1.msra.mxu0 %v1031
          %1033 = vmatprep.subr.mxu0 0.0
          %v1034 = vand.u32 %v336, 4294901760
          %v1035 = vsub.f32 %v336, %v1034
          %v1036 = vand.u32 %v1035, 4294901760
          %1037 = vmatpush1.msra.mxu0 %v1036
          %1038 = vmatprep.subr.mxu0 0.0
          %v1039 = vand.u32 %v337, 4294901760
          %v1040 = vsub.f32 %v337, %v1039
          %v1041 = vand.u32 %v1040, 4294901760
          %1042 = vmatpush1.msra.mxu0 %v1041
          %1043 = vmatprep.subr.mxu0 0.0
          %v1044 = vand.u32 %v338, 4294901760
          %v1045 = vsub.f32 %v338, %v1044
          %v1046 = vand.u32 %v1045, 4294901760
          %1047 = vmatpush1.msra.mxu0 %v1046
          %1048 = vmatprep.subr.mxu0 0.0
          %v1049 = vand.u32 %v339, 4294901760
          %v1050 = vsub.f32 %v339, %v1049
          %v1051 = vand.u32 %v1050, 4294901760
          %1052 = vmatpush1.msra.mxu0 %v1051
          %1053 = vmatprep.subr.mxu0 0.0
          %v1054 = vand.u32 %v340, 4294901760
          %v1055 = vsub.f32 %v340, %v1054
          %v1056 = vand.u32 %v1055, 4294901760
          %1057 = vmatpush1.msra.mxu0 %v1056
          %1058 = vmatprep.subr.mxu0 0.0
          %v1059 = vand.u32 %v341, 4294901760
          %v1060 = vsub.f32 %v341, %v1059
          %v1061 = vand.u32 %v1060, 4294901760
          %1062 = vmatpush1.msra.mxu0 %v1061
          %1063 = vmatprep.subr.mxu0 0.0
          %v1064 = vand.u32 %v342, 4294901760
          %v1065 = vsub.f32 %v342, %v1064
          %v1066 = vand.u32 %v1065, 4294901760
          %1067 = vmatpush1.msra.mxu0 %v1066
          %1068 = vmatprep.subr.mxu0 0.0
          %v1069 = vand.u32 %v343, 4294901760
          %v1070 = vsub.f32 %v343, %v1069
          %v1071 = vand.u32 %v1070, 4294901760
          %1072 = vmatpush1.msra.mxu0 %v1071
          %1073 = vmatprep.subr.mxu0 0.0
          %v1074 = vand.u32 %v344, 4294901760
          %v1075 = vsub.f32 %v344, %v1074
          %v1076 = vand.u32 %v1075, 4294901760
          %1077 = vmatpush1.msra.mxu0 %v1076
          %1078 = vmatprep.subr.mxu0 0.0
          %v1079 = vand.u32 %v345, 4294901760
          %v1080 = vsub.f32 %v345, %v1079
          %v1081 = vand.u32 %v1080, 4294901760
          %1082 = vmatpush1.msra.mxu0 %v1081
          %1083 = vmatprep.subr.mxu0 0.0
          %v1084 = vand.u32 %v346, 4294901760
          %v1085 = vsub.f32 %v346, %v1084
          %v1086 = vand.u32 %v1085, 4294901760
          %1087 = vmatpush1.msra.mxu0 %v1086
          %1088 = vmatprep.subr.mxu0 0.0
          %v1089 = vand.u32 %v347, 4294901760
          %v1090 = vsub.f32 %v347, %v1089
          %v1091 = vand.u32 %v1090, 4294901760
          %1092 = vmatpush1.msra.mxu0 %v1091
          %1093 = vmatprep.subr.mxu0 0.0
          %v1094 = vand.u32 %v348, 4294901760
          %v1095 = vsub.f32 %v348, %v1094
          %v1096 = vand.u32 %v1095, 4294901760
          %1097 = vmatpush1.msra.mxu0 %v1096
          %1098 = vmatprep.subr.mxu0 0.0
          %v1099 = vand.u32 %v349, 4294901760
          %v1100 = vsub.f32 %v349, %v1099
          %v1101 = vand.u32 %v1100, 4294901760
          %1102 = vmatpush1.msra.mxu0 %v1101
          %v1103 = vand.u32 %v351, 4294901760
          %1104 = vmatprep.mubr.f32.mxu0 %v1103
          %v1105 = vand.u32 %v212, 4294901760
          %1106 = vmatmul.mubr.f32.gmra.mrb[0].mxu0 %v1105
          %v1107 = vpop.f32.mrb[0].mxu0
          %v1108 = vadd.f32 %v940, %v1107
          %v1109 = vpop.f32.mrb[0].mxu0
          %1110 = vdwg.mxu0
          %1111 = vmatprep.subr.mxu0 0.0
          %v1112 = vand.u32 %v318, 4294901760
          %1113 = vmatpush1.msra.mxu0 %v1112
          %1114 = vmatprep.subr.mxu0 0.0
          %v1115 = vand.u32 %v319, 4294901760
          %1116 = vmatpush1.msra.mxu0 %v1115
          %1117 = vmatprep.subr.mxu0 0.0
          %v1118 = vand.u32 %v320, 4294901760
          %1119 = vmatpush1.msra.mxu0 %v1118
          %1120 = vmatprep.subr.mxu0 0.0
          %v1121 = vand.u32 %v321, 4294901760
          %1122 = vmatpush1.msra.mxu0 %v1121
          %1123 = vmatprep.subr.mxu0 0.0
          %v1124 = vand.u32 %v322, 4294901760
          %1125 = vmatpush1.msra.mxu0 %v1124
          %1126 = vmatprep.subr.mxu0 0.0
          %v1127 = vand.u32 %v323, 4294901760
          %1128 = vmatpush1.msra.mxu0 %v1127
          %1129 = vmatprep.subr.mxu0 0.0
          %v1130 = vand.u32 %v324, 4294901760
          %1131 = vmatpush1.msra.mxu0 %v1130
          %1132 = vmatprep.subr.mxu0 0.0
          %v1133 = vand.u32 %v325, 4294901760
          %1134 = vmatpush1.msra.mxu0 %v1133
          %1135 = vmatprep.subr.mxu0 0.0
          %v1136 = vand.u32 %v326, 4294901760
          %1137 = vmatpush1.msra.mxu0 %v1136
          %1138 = vmatprep.subr.mxu0 0.0
          %v1139 = vand.u32 %v327, 4294901760
          %1140 = vmatpush1.msra.mxu0 %v1139
          %1141 = vmatprep.subr.mxu0 0.0
          %v1142 = vand.u32 %v328, 4294901760
          %1143 = vmatpush1.msra.mxu0 %v1142
          %1144 = vmatprep.subr.mxu0 0.0
          %v1145 = vand.u32 %v329, 4294901760
          %1146 = vmatpush1.msra.mxu0 %v1145
          %1147 = vmatprep.subr.mxu0 0.0
          %v1148 = vand.u32 %v330, 4294901760
          %1149 = vmatpush1.msra.mxu0 %v1148
          %1150 = vmatprep.subr.mxu0 0.0
          %v1151 = vand.u32 %v331, 4294901760
          %1152 = vmatpush1.msra.mxu0 %v1151
          %1153 = vmatprep.subr.mxu0 0.0
          %v1154 = vand.u32 %v332, 4294901760
          %1155 = vmatpush1.msra.mxu0 %v1154
          %1156 = vmatprep.subr.mxu0 0.0
          %v1157 = vand.u32 %v333, 4294901760
          %1158 = vmatpush1.msra.mxu0 %v1157
          %1159 = vmatprep.subr.mxu0 0.0
          %v1160 = vand.u32 %v334, 4294901760
          %1161 = vmatpush1.msra.mxu0 %v1160
          %1162 = vmatprep.subr.mxu0 0.0
          %v1163 = vand.u32 %v335, 4294901760
          %1164 = vmatpush1.msra.mxu0 %v1163
          %1165 = vmatprep.subr.mxu0 0.0
          %v1166 = vand.u32 %v336, 4294901760
          %1167 = vmatpush1.msra.mxu0 %v1166
          %1168 = vmatprep.subr.mxu0 0.0
          %v1169 = vand.u32 %v337, 4294901760
          %1170 = vmatpush1.msra.mxu0 %v1169
          %1171 = vmatprep.subr.mxu0 0.0
          %v1172 = vand.u32 %v338, 4294901760
          %1173 = vmatpush1.msra.mxu0 %v1172
          %1174 = vmatprep.subr.mxu0 0.0
          %v1175 = vand.u32 %v339, 4294901760
          %1176 = vmatpush1.msra.mxu0 %v1175
          %1177 = vmatprep.subr.mxu0 0.0
          %v1178 = vand.u32 %v340, 4294901760
          %1179 = vmatpush1.msra.mxu0 %v1178
          %1180 = vmatprep.subr.mxu0 0.0
          %v1181 = vand.u32 %v341, 4294901760
          %1182 = vmatpush1.msra.mxu0 %v1181
          %1183 = vmatprep.subr.mxu0 0.0
          %v1184 = vand.u32 %v342, 4294901760
          %1185 = vmatpush1.msra.mxu0 %v1184
          %1186 = vmatprep.subr.mxu0 0.0
          %v1187 = vand.u32 %v343, 4294901760
          %1188 = vmatpush1.msra.mxu0 %v1187
          %1189 = vmatprep.subr.mxu0 0.0
          %v1190 = vand.u32 %v344, 4294901760
          %1191 = vmatpush1.msra.mxu0 %v1190
          %1192 = vmatprep.subr.mxu0 0.0
          %v1193 = vand.u32 %v345, 4294901760
          %1194 = vmatpush1.msra.mxu0 %v1193
          %1195 = vmatprep.subr.mxu0 0.0
          %v1196 = vand.u32 %v346, 4294901760
          %1197 = vmatpush1.msra.mxu0 %v1196
          %1198 = vmatprep.subr.mxu0 0.0
          %v1199 = vand.u32 %v347, 4294901760
          %1200 = vmatpush1.msra.mxu0 %v1199
          %1201 = vmatprep.subr.mxu0 0.0
          %v1202 = vand.u32 %v348, 4294901760
          %1203 = vmatpush1.msra.mxu0 %v1202
          %1204 = vmatprep.subr.mxu0 0.0
          %v1205 = vand.u32 %v349, 4294901760
          %1206 = vmatpush1.msra.mxu0 %v1205
          %v1207 = vand.u32 %v351, 4294901760
          %1208 = vmatprep.mubr.f32.mxu0 %v1207
          %v1209 = vand.u32 %v212, 4294901760
          %1210 = vmatmul.mubr.f32.gmra.mrb[0].mxu0 %v1209
          %v1211 = vpop.f32.mrb[0].mxu0
          %v1212 = vadd.f32 %v1108, %v1211
          %v1213 = vpop.f32.mrb[0].mxu0
          %1214 = vdwg.mxu0
          %vm1215 = vcmask 60416
          %1216 = vst.msk [vmem:[%s195] sm:$0xf] %vm1215, %v1212
        $region36: #{tpu_custom_call.1} parent=27 // pred_fallthru
          _
        %p1217 = scmp.eq.s32.totalorder %s207, 0
        // Predicated region
        $region37: #{tpu_custom_call.1} parent=27 // pred_check
          %p1218 = pneg %p1217
        $region38: #{tpu_custom_call.1} parent=27 // pred_check_branch
          %1220 = sbr.rel (%p1218) target = $region40
        $region39: #{tpu_custom_call.1} parent=27 // pred_region
          %vm1221 = vcmask 60416
          %1222 = vst.msk [vmem:[%s195] sm:$0xf] %vm1221, 0.0
        $region40: #{tpu_custom_call.1} parent=27 // pred_fallthru
          _
        %s1223 = sand.u32 %s102, 1
        %s1224 = scalar_lea.sflag [#allocation6], %s1223
        %s1225 = sand.u32 %s102, 1
        %s1226 = smul.addr %s1225, 4
        %s1227 = scalar_lea.vmem [#allocation7], %s1226
        // Predicated region
        $region41: #{tpu_custom_call.1} parent=27 // pred_check
          %p1228 = pneg %p112
        $region42: #{tpu_custom_call.1} parent=27 // pred_check_branch
          %1230 = sbr.rel (%p1228) target = $region44
        $region43: #{tpu_custom_call.1} parent=27 // pred_region
          %s1232 = ssub.s32 64, 64
          %1233 = vsyncadd %s1224, %s1232
          %s1234 = sadd.s32 %s31, %s30
          %s1235 = smul.addr %s1234, 64
          %s1236 = scalar_lea.hbm %s3, %s1235
          %s1238 = sshll.u32 %s1227, 4
          %s1239 = int_to_ptr.vmem [resolvable:$true] %s1238
          %1241 = dma.vmem_to_hbm [thread:$0]  %s1239, 64, %s1236, %s1224
        $region44: #{tpu_custom_call.1} parent=27 // pred_fallthru
          _
      $region28: #{tpu_custom_call.1} parent=5 // pred_fallthru
        _
      %p1242 = scmp.le.s32.totalorder 2, %s21
      // Predicated region
      $region45: #{tpu_custom_call.1} parent=5 // pred_check
        %p1243 = pneg %p1242
      $region46: #{tpu_custom_call.1} parent=5 // pred_check_branch
        %1245 = sbr.rel (%p1243) target = $region48
      $region47: #{tpu_custom_call.1} parent=5 // pred_region
        %s1246 = ssub.s32 %s21, 2
        // Predicated region
        $region49: #{tpu_custom_call.1} parent=47 // pred_check
          %p1247 = pneg %p118
        $region50: #{tpu_custom_call.1} parent=47 // pred_check_branch
          %1249 = sbr.rel (%p1247) target = $region52
        $region51: #{tpu_custom_call.1} parent=47 // pred_region
          %s1250 = sand.u32 %s103, 1
          %s1251 = scalar_lea.sflag [#allocation6], %s1250
          %s1252 = sand.u32 %s103, 1
          %s1253 = smul.addr %s1252, 4
          %s1254 = scalar_lea.vmem [#allocation7], %s1253
          %1255 = dma.done %s1251, 64
        $region52: #{tpu_custom_call.1} parent=47 // pred_fallthru
          _
      $region48: #{tpu_custom_call.1} parent=5 // pred_fallthru
        _
    $region6: #{tpu_custom_call.1} parent=1 // loop_footer
      %s25 = sadd.s32 1, %s21
    $region7: #{tpu_custom_call.1} parent=1 // loop_footer_branch
      %20 = sbr.rel target = $region3
    $region8: #{tpu_custom_call.1} parent=1 // loop_exit
      _
    %1256 = vsyncpa [#allocation5], 1
    %s1257 = scalar_lea.sflag [#allocation5], 1
    %1258 = vsyncpa %s1257, 1
    %1259 = vsyncpa [#allocation6], 1
    %s1260 = scalar_lea.sflag [#allocation6], 1
    %1261 = vsyncpa %s1260, 1

</llo_original>
